<compile_context>
chip_gen: v6e
topology: v6e:2x2x1
jax: 0.10.0
libtpu: 0.0.40
codegen_flags: <defaults>
</compile_context>

<pallas_src>
import functools
import math

import jax
import jax.numpy as jnp
from jax.experimental import pallas as pl
from jax.experimental.pallas import tpu as pltpu

LANE = 128
SUBLANE = 8
MAX_BLOCK_ROWS = 4096          # 4096 x 128 f32 = 2 MiB per input block
TARGET_BLOCKS = 8              # keep >= ~8 grid steps so v7x can balance both TensorCores
VMEM_LIMIT_BYTES = 32 * 1024 * 1024


def _int_pow(w, gamma: float):
    """(w ** gamma) with small integer gamma specialized to multiplies (no exp/log on the EUP)."""
    g = float(gamma)
    if g == int(g) and 0 <= int(g) <= 8:
        e = int(g)
        if e == 0:
            return jnp.ones_like(w)
        result = None
        base = w
        while e:
            if e & 1:
                result = base if result is None else result * base
            e >>= 1
            if e:
                base = base * base
        return result
    return w ** gamma  # non-integer gamma: fall back to pow


def _focal_loss_kernel(x_ref, t_ref, o_ref, *, alpha, gamma, eps, rem, mask_last):
    """One grid step: focal loss on a (block_rows, 128) slab, reduced to an (8, 128) partial sum."""
    x = x_ref[...].astype(jnp.float32)
    t = t_ref[...].astype(jnp.float32)

    log_eps = math.log(eps)
    log_1meps = math.log1p(-eps)

    # Stable log-sigmoid / softplus identity (1 exp + 1 log + 1 div on the EUP):
    #   e = exp(-|x|) in (0, 1]
    #   log(sigmoid(x))     = min(x, 0) - log(1 + e)
    #   log(1 - sigmoid(x)) = log(sigmoid(x)) - x
    #   sigmoid(x)          = 1/(1+e) if x >= 0 else e/(1+e)
    # Explicit clamps on the log values reproduce torch.clamp(sigmoid(x), eps, 1-eps) + log.
    e = jnp.exp(-jnp.abs(x))
    one_plus_e = 1.0 + e
    l1p = jnp.log(one_plus_e)
    r = 1.0 / one_plus_e
    p = jnp.where(x >= 0.0, r, e * r)          # sigmoid(x)
    p = jnp.clip(p, eps, 1.0 - eps)            # matches torch.clamp(min=eps, max=1-eps)
    log_p_raw = jnp.minimum(x, 0.0) - l1p
    log_p = jnp.clip(log_p_raw, log_eps, log_1meps)        # log(clamped p)
    log_1mp = jnp.clip(log_p_raw - x, log_eps, log_1meps)  # log(1 - clamped p)

    # bce = -(t*log(p) + (1-t)*log(1-p)), folded.
    bce = -log_1mp - t * (log_p - log_1mp)

    # 1 - p_t = 1 - (p*t + (1-p)*(1-t)) = p + t - 2*p*t, folded.
    pt = p * t
    one_minus_pt = (p - pt) + (t - pt)
    focal_weight = _int_pow(one_minus_pt, gamma)

    # alpha*t + (1-alpha)*(1-t) = (1-alpha) + (2*alpha - 1)*t; constants fold at trace time.
    alpha_weight = (1.0 - alpha) + (2.0 * alpha - 1.0) * t

    loss = alpha_weight * focal_weight * bce

    def reduce_store(l):
        # (block_rows, 128) -> (8, 128) per-lane partial sums: pure VPU adds, no XLU.
        o_ref[...] = l.reshape(-1, SUBLANE, LANE).sum(axis=0)

    if mask_last:  # trace-time flag: the last block has out-of-bounds (garbage-padded) rows
        is_last = pl.program_id(0) == pl.num_programs(0) - 1

        @pl.when(is_last)
        def _():
            # Block-local indices only (< 2^31): mask *before* the single reduce + store.
            row_ids = jax.lax.broadcasted_iota(jnp.int32, loss.shape, 0)
            col_ids = jax.lax.broadcasted_iota(jnp.int32, loss.shape, 1)
            local_flat = row_ids * LANE + col_ids
            reduce_store(jnp.where(local_flat < rem, loss, 0.0))

        @pl.when(jnp.logical_not(is_last))
        def _():
            reduce_store(loss)
    else:
        reduce_store(loss)


def _focal_sum_jnp(x, t, alpha, gamma, eps):
    """Plain-jnp focal-loss *sum* for tiny tails (< 128 elements) / tiny inputs."""
    x = x.astype(jnp.float32)
    t = t.astype(jnp.float32)
    p = jnp.clip(jax.nn.sigmoid(x), eps, 1.0 - eps)
    bce = -(t * jnp.log(p) + (1.0 - t) * jnp.log(1.0 - p))
    p_t = p * t + (1.0 - p) * (1.0 - t)
    fw = _int_pow(1.0 - p_t, gamma)
    aw = alpha * t + (1.0 - alpha) * (1.0 - t)
    return jnp.sum(aw * fw * bce)


def focal_loss(inputs, targets, *, alpha: float, gamma: float, eps: float = 1e-6):
    """Pallas TPU focal loss.

    inputs: pre-sigmoid logits, targets: values in {0, 0.5, 1}. Inputs may be f32 or bf16
    (targets {0,0.5,1} are exact in bf16); the kernel upcasts per block, so no wrapper-side cast.
    """
    alpha = float(alpha)
    gamma = float(gamma)
    eps = float(eps)

    n = inputs.size
    x_flat = inputs.reshape(-1)   # zero-copy flatten of the contiguous buffer
    t_flat = targets.reshape(-1)

    n_main = (n // LANE) * LANE   # elements streamed through the Pallas kernel
    tail = n - n_main             # < 128 leftover elements handled in plain jnp
    rows = n_main // LANE

    if rows < SUBLANE:
        # Tiny input (< one (8,128) tile): not worth a kernel launch.
        return _focal_sum_jnp(x_flat, t_flat, alpha, gamma, eps) / jnp.float32(n)

    # Common NCHW sizes have n % 128 == 0 -> fully zero-copy. Otherwise only the aligned
    # prefix goes through the kernel (no full-array jnp.pad copy of both tensors).
    x_main = x_flat if tail == 0 else x_flat[:n_main]
    t_main = t_flat if tail == 0 else t_flat[:n_main]
    x2 = x_main.reshape(rows, LANE)
    t2 = t_main.reshape(rows, LANE)

    # Block sizing: as large as possible (amortize ~0.35us/step pipeline overhead) while
    # keeping ~TARGET_BLOCKS grid steps for v7x 2-TC load balance; multiple of 16 rows so
    # bf16 inputs stay sublane-packed.
    desired = pl.cdiv(pl.cdiv(rows, TARGET_BLOCKS), 16) * 16
    block_rows = min(MAX_BLOCK_ROWS, desired, (rows // SUBLANE) * SUBLANE)
    block_rows = max(block_rows, SUBLANE)
    num_blocks = pl.cdiv(rows, block_rows)

    # Number of valid elements covered by the last grid step (last block may be row-ragged;
    # Pallas garbage-pads it and we mask in-kernel).
    rem = n_main - (num_blocks - 1) * block_rows * LANE
    mask_last = rem != block_rows * LANE

    kernel = functools.partial(
        _focal_loss_kernel,
        alpha=alpha, gamma=gamma, eps=eps, rem=rem, mask_last=mask_last,
    )

    is_int_gamma = gamma == int(gamma) and 0 <= int(gamma) <= 8
    transcendentals = (3 if is_int_gamma else 5) * n_main  # exp + log + div (+ pow's exp/log)
    bytes_accessed = (int(x2.size) * x2.dtype.itemsize
                      + int(t2.size) * t2.dtype.itemsize
                      + num_blocks * SUBLANE * LANE * 4)

    partials = pl.pallas_call(
        kernel,
        out_shape=jax.ShapeDtypeStruct((num_blocks * SUBLANE, LANE), jnp.float32),
        grid_spec=pltpu.PrefetchScalarGridSpec(
            num_scalar_prefetch=0,
            grid=(num_blocks,),
            in_specs=[
                pl.BlockSpec((block_rows, LANE), lambda i: (i, 0)),
                pl.BlockSpec((block_rows, LANE), lambda i: (i, 0)),
            ],
            out_specs=pl.BlockSpec((SUBLANE, LANE), lambda i: (i, 0)),
        ),
        compiler_params=pltpu.CompilerParams(
            # Each step writes an independent output block -> truly parallel; lets v7x shard
            # blocks across both TensorCores (harmless on v5e/v6e).
            # TODO(synk): if a v7x trace shows no real 2-TC split, switch to a leading
            # CORE_PARALLEL grid axis of size 2.
            dimension_semantics=("parallel",),
            vmem_limit_bytes=VMEM_LIMIT_BYTES,
        ),
        cost_estimate=pl.CostEstimate(
            flops=22 * n_main,
            transcendentals=transcendentals,
            bytes_accessed=bytes_accessed,
        ),
    )(x2, t2)

    total = jnp.sum(partials)
    if tail:
        total = total + _focal_sum_jnp(x_flat[n_main:], t_flat[n_main:], alpha, gamma, eps)
    return total / jnp.float32(n)


def _focal_loss_ref(inputs, targets, *, alpha, gamma, eps=1e-6):
    p = jnp.clip(jax.nn.sigmoid(inputs.reshape(-1).astype(jnp.float32)), eps, 1.0 - eps)
    t = targets.reshape(-1).astype(jnp.float32)
    bce = -(t * jnp.log(p) + (1.0 - t) * jnp.log(1.0 - p))
    p_t = p * t + (1.0 - p) * (1.0 - t)
    fw = (1.0 - p_t) ** gamma
    aw = alpha * t + (1.0 - alpha) * (1.0 - t)
    return jnp.mean(aw * fw * bce)


if __name__ == "__main__":
    # FocalLoss __init__ has no tensors, only alpha/gamma scalars.
    ALPHA = 0.25
    GAMMA = 2.0

    key = jax.random.PRNGKey(0)
    k1, k2, k3, k4, k5, k6 = jax.random.split(key, 6)

    # 1) Aligned path: 2*4*16*16 = 2048 = 16*128 -> zero-copy reshape, single block.
    x = jax.random.normal(k1, (2, 4, 16, 16), dtype=jnp.float32)
    t = jax.random.randint(k2, (2, 4, 16, 16), 0, 3).astype(jnp.float32) * 0.5
    loss = jax.block_until_ready(focal_loss(x, t, alpha=ALPHA, gamma=GAMMA))
    ref = _focal_loss_ref(x, t, alpha=ALPHA, gamma=GAMMA)
    assert jnp.allclose(loss, ref, rtol=1e-5, atol=1e-6), (loss, ref)

    # 2) Ragged path: 2*5*11*13 = 1430 -> 1408-element Pallas prefix with a row-ragged last
    #    block (exercises the in-kernel mask) + a 22-element jnp tail.
    x_r = jax.random.normal(k3, (2, 5, 11, 13), dtype=jnp.float32)
    t_r = jax.random.randint(k4, (2, 5, 11, 13), 0, 3).astype(jnp.float32) * 0.5
    loss_r = jax.block_until_ready(focal_loss(x_r, t_r, alpha=ALPHA, gamma=GAMMA))
    ref_r = _focal_loss_ref(x_r, t_r, alpha=ALPHA, gamma=GAMMA)
    assert jnp.allclose(loss_r, ref_r, rtol=1e-5, atol=1e-6), (loss_r, ref_r)

    # 3) Tiny input (< 8*128 elements): pure-jnp fallback path.
    x_s = jax.random.normal(k5, (2, 3, 7, 9), dtype=jnp.float32)
    t_s = jax.random.randint(k6, (2, 3, 7, 9), 0, 3).astype(jnp.float32) * 0.5
    loss_s = jax.block_until_ready(focal_loss(x_s, t_s, alpha=ALPHA, gamma=GAMMA))
    ref_s = _focal_loss_ref(x_s, t_s, alpha=ALPHA, gamma=GAMMA)
    assert jnp.allclose(loss_s, ref_s, rtol=1e-5, atol=1e-6), (loss_s, ref_s)

    print("KERNEL_OK")
</pallas_src>

<mosaic_0001>
module attributes {stable_mosaic.version = 11 : i64} {
  func.func @_focal_loss_kernel(%arg0: i32, %arg1: memref<16x128xf32, #tpu.memory_space<vmem>>, %arg2: memref<16x128xf32, #tpu.memory_space<vmem>>, %arg3: memref<8x128xf32, #tpu.memory_space<vmem>>) attributes {dimension_semantics = [#tpu.dimension_semantics<parallel>], iteration_bounds = array<i64: 1>, scalar_prefetch = 0 : i64, scratch_operands = 0 : i64, tpu.core_type = #tpu.core_type<tc>, window_params = [{transform_indices = @transform_0, window_bounds = array<i64: 16, 128>}, {transform_indices = @transform_1, window_bounds = array<i64: 16, 128>}, {transform_indices = @transform_2, window_bounds = array<i64: 8, 128>}]} {
    %c0 = arith.constant 0 : index
    %c0_0 = arith.constant 0 : index
    %0 = vector.load %arg1[%c0, %c0_0] : memref<16x128xf32, #tpu.memory_space<vmem>>, vector<16x128xf32>
    %c0_1 = arith.constant 0 : index
    %c0_2 = arith.constant 0 : index
    %1 = vector.load %arg2[%c0_1, %c0_2] : memref<16x128xf32, #tpu.memory_space<vmem>>, vector<16x128xf32>
    %2 = math.absf %0 : vector<16x128xf32>
    %cst = arith.constant 0.000000e+00 : f32
    %3 = vector.broadcast %cst : f32 to vector<16x128xf32>
    %4 = arith.subf %3, %2 : vector<16x128xf32>
    %5 = math.exp %4 : vector<16x128xf32>
    %cst_3 = arith.constant 1.000000e+00 : f32
    %6 = vector.broadcast %cst_3 : f32 to vector<16x128xf32>
    %7 = arith.addf %6, %5 : vector<16x128xf32>
    %8 = math.log %7 : vector<16x128xf32>
    %cst_4 = arith.constant 1.000000e+00 : f32
    %9 = vector.broadcast %cst_4 : f32 to vector<16x128xf32>
    %10 = arith.divf %9, %7 : vector<16x128xf32>
    %cst_5 = arith.constant 0.000000e+00 : f32
    %11 = vector.broadcast %cst_5 : f32 to vector<16x128xf32>
    %12 = arith.cmpf oge, %0, %11 : vector<16x128xf32>
    %13 = arith.mulf %5, %10 : vector<16x128xf32>
    %14 = arith.select %12, %10, %13 : vector<16x128xi1>, vector<16x128xf32>
    %cst_6 = arith.constant 9.99999997E-7 : f32
    %cst_7 = arith.constant 0.999998986 : f32
    %15 = vector.broadcast %cst_6 : f32 to vector<16x128xf32>
    %16 = arith.maximumf %15, %14 : vector<16x128xf32>
    %17 = vector.broadcast %cst_7 : f32 to vector<16x128xf32>
    %18 = arith.minimumf %17, %16 : vector<16x128xf32>
    %cst_8 = arith.constant 0.000000e+00 : f32
    %19 = vector.broadcast %cst_8 : f32 to vector<16x128xf32>
    %20 = arith.minimumf %0, %19 : vector<16x128xf32>
    %21 = arith.subf %20, %8 : vector<16x128xf32>
    %cst_9 = arith.constant -13.8155107 : f32
    %cst_10 = arith.constant -1.00000045E-6 : f32
    %22 = vector.broadcast %cst_9 : f32 to vector<16x128xf32>
    %23 = arith.maximumf %22, %21 : vector<16x128xf32>
    %24 = vector.broadcast %cst_10 : f32 to vector<16x128xf32>
    %25 = arith.minimumf %24, %23 : vector<16x128xf32>
    %26 = arith.subf %21, %0 : vector<16x128xf32>
    %cst_11 = arith.constant -13.8155107 : f32
    %cst_12 = arith.constant -1.00000045E-6 : f32
    %27 = vector.broadcast %cst_11 : f32 to vector<16x128xf32>
    %28 = arith.maximumf %27, %26 : vector<16x128xf32>
    %29 = vector.broadcast %cst_12 : f32 to vector<16x128xf32>
    %30 = arith.minimumf %29, %28 : vector<16x128xf32>
    %cst_13 = arith.constant 0.000000e+00 : f32
    %31 = vector.broadcast %cst_13 : f32 to vector<16x128xf32>
    %32 = arith.subf %31, %30 : vector<16x128xf32>
    %33 = arith.subf %25, %30 : vector<16x128xf32>
    %34 = arith.mulf %1, %33 : vector<16x128xf32>
    %35 = arith.subf %32, %34 : vector<16x128xf32>
    %36 = arith.mulf %18, %1 : vector<16x128xf32>
    %37 = arith.subf %18, %36 : vector<16x128xf32>
    %38 = arith.subf %1, %36 : vector<16x128xf32>
    %39 = arith.addf %37, %38 : vector<16x128xf32>
    %40 = arith.mulf %39, %39 : vector<16x128xf32>
    %cst_14 = arith.constant -5.000000e-01 : f32
    %41 = vector.broadcast %cst_14 : f32 to vector<16x128xf32>
    %42 = arith.mulf %41, %1 : vector<16x128xf32>
    %cst_15 = arith.constant 7.500000e-01 : f32
    %43 = vector.broadcast %cst_15 : f32 to vector<16x128xf32>
    %44 = arith.addf %43, %42 : vector<16x128xf32>
    %45 = arith.mulf %44, %40 : vector<16x128xf32>
    %46 = arith.mulf %45, %35 : vector<16x128xf32>
    %47 = vector.shape_cast %46 : vector<16x128xf32> to vector<2x8x128xf32>
    %cst_16 = arith.constant dense<0.000000e+00> : vector<8x128xf32>
    %48 = vector.multi_reduction <add>, %47, %cst_16 [0] : vector<2x8x128xf32> to vector<8x128xf32>
    %c0_17 = arith.constant 0 : index
    %c0_18 = arith.constant 0 : index
    %49 = vector.load %arg3[%c0_17, %c0_18] : memref<8x128xf32, #tpu.memory_space<vmem>>, vector<8x128xf32>
    tpu.vector_store %arg3[%c0_17, %c0_18], %48 {strides = array<i32>} : memref<8x128xf32, #tpu.memory_space<vmem>>, vector<8x128xf32>,
    return
  }
  func.func @transform_0(%arg0: i32) -> (i32, i32) {
    %c0_i32 = arith.constant 0 : i32
    %c0_i32_0 = arith.constant 0 : i32
    return %arg0, %c0_i32 : i32, i32
  }
  func.func @transform_1(%arg0: i32) -> (i32, i32) {
    %c0_i32 = arith.constant 0 : i32
    %c0_i32_0 = arith.constant 0 : i32
    return %arg0, %c0_i32 : i32, i32
  }
  func.func @transform_2(%arg0: i32) -> (i32, i32) {
    %c0_i32 = arith.constant 0 : i32
    %c0_i32_0 = arith.constant 0 : i32
    return %arg0, %c0_i32 : i32, i32
  }
}

</mosaic_0001>

<llo_original>
// kernel: tpu_custom_call.1
$region0: #{tpu_custom_call.1}
  #allocation0 [shape = 'u32[]', space=smem, size = 0x4, offset = 0x4, fixed_abs, tag = 'smem constant byte address 0x4 - core index']
  #allocation1 [shape = 'u32[144,128]{1,0:T(1,128)}', space=vmem, size = 0x12000, scoped, tag = 'internal scratch']
  %s0 = inlined_call_operand.hbm [shape: f32[16,128], index: 0, kind: input, shape index: {}]
  %s1 = inlined_call_operand.hbm [shape: f32[16,128], index: 1, kind: input, shape index: {}]
  %s2 = inlined_call_operand.hbm [shape: f32[8,128], index: 2, kind: output, shape index: {}]
  %s3 = sld [smem:[#allocation0]]
  $region26: #{tpu_custom_call.1} parent=0
    _
  %s5 = ssub.s32 1, %s3
  %s6 = scalar_select 0, %s5, %s3
  $region1: #{tpu_custom_call.1} parent=0
    #allocation2 [shape = 'u8[8192]{0}', space=vmem, size = 0x2000, scoped, tag = 'input window, operand 0, single buffered']
    #allocation3 [shape = 's32[1]{0}', space=sflag, size = 0x4, scoped, tag = 'scoped memory for tpu_custom_call.1']
    #allocation4 [shape = 's32[1]{0}', space=sflag, size = 0x4, scoped, tag = 'scoped memory for tpu_custom_call.1']
    #allocation5 [shape = 'u8[8192]{0}', space=vmem, size = 0x2000, scoped, tag = 'input window, operand 1, single buffered']
    #allocation6 [shape = 's32[1]{0}', space=sflag, size = 0x4, scoped, tag = 'scoped memory for tpu_custom_call.1']
    #allocation7 [shape = 'u8[4096]{0}', space=vmem, size = 0x1000, scoped, tag = 'output window, operand 0, single buffered']
    %7 = vsyncpa [#allocation3], 0
    %8 = vsyncpa [#allocation6], 0
    %9 = vsyncpa [#allocation4], 0
    // Predicated region
    $region2: #{tpu_custom_call.1} parent=1 // pred_check
      _
    $region3: #{tpu_custom_call.1} parent=1 // pred_check_branch
      %11 = sbr.rel (0) target = $region5
    $region4: #{tpu_custom_call.1} parent=1 // pred_region
      %s13 = ssub.s32 256, 256
      %14 = vsyncadd [#allocation3], %s13
      %s15 = sshll.u32 [#allocation2], 4
      %s16 = int_to_ptr.vmem [resolvable:$true] %s15
      %21 = dma.hbm_to_vmem [thread:$0]  %s0, 256, %s16, [#allocation3], 128, 128, 8
    $region5: #{tpu_custom_call.1} parent=1 // pred_fallthru
      _
    // Predicated region
    $region6: #{tpu_custom_call.1} parent=1 // pred_check
      _
    $region7: #{tpu_custom_call.1} parent=1 // pred_check_branch
      %23 = sbr.rel (0) target = $region9
    $region8: #{tpu_custom_call.1} parent=1 // pred_region
      %s25 = ssub.s32 256, 256
      %26 = vsyncadd [#allocation6], %s25
      %s27 = sshll.u32 [#allocation5], 4
      %s28 = int_to_ptr.vmem [resolvable:$true] %s27
      %33 = dma.hbm_to_vmem [thread:$0]  %s1, 256, %s28, [#allocation6], 128, 128, 8
    $region9: #{tpu_custom_call.1} parent=1 // pred_fallthru
      _
    // Predicated region
    $region10: #{tpu_custom_call.1} parent=1 // pred_check
      _
    $region11: #{tpu_custom_call.1} parent=1 // pred_check_branch
      %35 = sbr.rel (0) target = $region13
    $region12: #{tpu_custom_call.1} parent=1 // pred_region
      %36 = dma.done [#allocation3], 256
    $region13: #{tpu_custom_call.1} parent=1 // pred_fallthru
      _
    // Predicated region
    $region14: #{tpu_custom_call.1} parent=1 // pred_check
      _
    $region15: #{tpu_custom_call.1} parent=1 // pred_check_branch
      %38 = sbr.rel (0) target = $region17
    $region16: #{tpu_custom_call.1} parent=1 // pred_region
      %39 = dma.done [#allocation6], 256
    $region17: #{tpu_custom_call.1} parent=1 // pred_fallthru
      _
    %v40 = vld [vmem:[#allocation2] sm:$0xff]
    %v41 = vld [vmem:[#allocation2 + $0x8] sm:$0xff]
    %v42 = vld [vmem:[#allocation5] sm:$0xff]
    %v43 = vld [vmem:[#allocation5 + $0x8] sm:$0xff]
    %v44 = vand.u32 2147483647, %v40
    %v45 = vand.u32 2147483647, %v41
    %v46 = vsub.f32 0.0, %v44
    %v47 = vsub.f32 0.0, %v45
    %v48 = vmul.f32 %v46, 1.442695
    %v49 = vpow.pop %v48
    %v50 = vmul.f32 %v47, 1.442695
    %v51 = vpow.pop %v50
    %v52 = vadd.f32 %v49, 1.0
    %v53 = vadd.f32 %v51, 1.0
    %v54 = vlog2.pop %v52
    %v55 = vmul.f32 %v54, 0.6931472
    %v56 = vlog2.pop %v53
    %v57 = vmul.f32 %v56, 0.6931472
    %v58 = vrcp.pop %v52
    %v59 = vmul.f32 1.0, %v58
    %v60 = vrcp.pop %v53
    %v61 = vmul.f32 1.0, %v60
    %vm62 = vcmp.ge.f32.partialorder %v40, 0.0
    %vm63 = vcmp.ge.f32.partialorder %v41, 0.0
    %v64 = vmul.f32 %v49, %v59
    %v65 = vmul.f32 %v51, %v61
    %v66 = vsel %vm62, %v59, %v64
    %v67 = vsel %vm63, %v61, %v65
    %v68 = vmax.f32 %v66, 1e-06
    %v69 = vmax.f32 %v67, 1e-06
    %v70 = vmin.f32 %v68, 0.999999
    %v71 = vmin.f32 %v69, 0.999999
    %v72 = vmin.f32 %v40, 0.0
    %v73 = vmin.f32 %v41, 0.0
    %v74 = vsub.f32 %v72, %v55
    %v75 = vsub.f32 %v73, %v57
    %v76 = vmax.f32 %v74, -13.815511
    %v77 = vmax.f32 %v75, -13.815511
    %v78 = vmin.f32 %v76, -1.0000005e-06
    %v79 = vmin.f32 %v77, -1.0000005e-06
    %v80 = vsub.f32 %v74, %v40
    %v81 = vsub.f32 %v75, %v41
    %v82 = vmax.f32 %v80, -13.815511
    %v83 = vmax.f32 %v81, -13.815511
    %v84 = vmin.f32 %v82, -1.0000005e-06
    %v85 = vmin.f32 %v83, -1.0000005e-06
    %v86 = vsub.f32 0.0, %v84
    %v87 = vsub.f32 0.0, %v85
    %v88 = vsub.f32 %v78, %v84
    %v89 = vsub.f32 %v79, %v85
    %v90 = vmul.f32 %v42, %v88
    %v91 = vmul.f32 %v43, %v89
    %v92 = vsub.f32 %v86, %v90
    %v93 = vsub.f32 %v87, %v91
    %v94 = vmul.f32 %v70, %v42
    %v95 = vmul.f32 %v71, %v43
    %v96 = vsub.f32 %v70, %v94
    %v97 = vsub.f32 %v71, %v95
    %v98 = vsub.f32 %v42, %v94
    %v99 = vsub.f32 %v43, %v95
    %v100 = vadd.f32 %v96, %v98
    %v101 = vadd.f32 %v97, %v99
    %v102 = vmul.f32 %v100, %v100
    %v103 = vmul.f32 %v101, %v101
    %v104 = vmul.f32 %v42, -0.5
    %v105 = vmul.f32 %v43, -0.5
    %v106 = vadd.f32 %v104, 0.75
    %v107 = vadd.f32 %v105, 0.75
    %v108 = vmul.f32 %v106, %v102
    %v109 = vmul.f32 %v107, %v103
    %v110 = vmul.f32 %v108, %v92
    %v111 = vmul.f32 %v109, %v93
    %v112 = vadd.f32 %v110, %v111
    %113 = vst [vmem:[#allocation7] sm:$0xff] %v112
    // Predicated region
    $region18: #{tpu_custom_call.1} parent=1 // pred_check
      _
    $region19: #{tpu_custom_call.1} parent=1 // pred_check_branch
      %115 = sbr.rel (0) target = $region21
    $region20: #{tpu_custom_call.1} parent=1 // pred_region
      %s117 = ssub.s32 128, 128
      %118 = vsyncadd [#allocation4], %s117
      %s120 = sshll.u32 [#allocation7], 4
      %s121 = int_to_ptr.vmem [resolvable:$true] %s120
      %123 = dma.vmem_to_hbm [thread:$0]  %s121, 128, %s2, [#allocation4]
    $region21: #{tpu_custom_call.1} parent=1 // pred_fallthru
      _
    // Predicated region
    $region22: #{tpu_custom_call.1} parent=1 // pred_check
      _
    $region23: #{tpu_custom_call.1} parent=1 // pred_check_branch
      %125 = sbr.rel (0) target = $region25
    $region24: #{tpu_custom_call.1} parent=1 // pred_region
      %126 = dma.done [#allocation4], 128
    $region25: #{tpu_custom_call.1} parent=1 // pred_fallthru
      _
    %127 = vsyncpa [#allocation3], 1
    %128 = vsyncpa [#allocation6], 1
    %129 = vsyncpa [#allocation4], 1

</llo_original>
